<compile_context>
chip_gen: v5e
topology: v5e:2x2
jax: 0.10.0
libtpu: 0.0.40
codegen_flags: <defaults>
</compile_context>

<pallas_src>
import jax
import jax.numpy as jnp
from jax.experimental import pallas as pl
from jax.experimental.pallas import tpu as pltpu


def _round_up(x, m):
    return -(-x // m) * m


def _acsp_init_embed_kernel(feat_ref, wb_ref, w_ref, out_ref):
    # feat_ref: [TB, TN, 3]  packed (x, y, max_cover)
    # wb_ref:   [TB, 1, D]   weather @ W[3:6] + bias, per batch row (f32)
    # w_ref:    [3, D]       node-feature weight rows (resident)
    # out_ref:  [TB, TN, D]
    feats = feat_ref[...].astype(jnp.float32)
    w = w_ref[...].astype(jnp.float32)
    # Per-node contribution: pure VPU broadcast FMAs (f32 accumulation).
    node = (feats[:, :, 0:1] * w[0:1, :]
            + feats[:, :, 1:2] * w[1:2, :]
            + feats[:, :, 2:3] * w[2:3, :])            # [TB, TN, D]
    # Broadcast the per-batch (weather + bias) term across nodes and store
    # (lane-dense when D is a multiple of 128).
    out_ref[...] = (node + wb_ref[...]).astype(out_ref.dtype)


def _vmem_policy(vmem_limit_bytes, vmem_budget_bytes, target_out_bytes):
    """Generation-aware VMEM sizing.

    v5e/v6e (128 MiB physical) -> ~96 MiB scoped limit; v7x (64 MiB physical)
    -> ~48 MiB.  Budget for tiling keeps ~15% headroom for Mosaic internal
    scratch.  Per-step output target is larger on v7x (faster HBM makes the
    ~0.35 us/step overhead visible)."""
    cap = None
    try:
        cap = int(getattr(pltpu.get_tpu_info(), "vmem_capacity_bytes", 0)) or None
    except Exception:
        cap = None
    if cap is None:
        try:
            kind = jax.devices()[0].device_kind.lower()
        except Exception:
            kind = ""
        cap = (128 << 20) if ("v5" in kind or "v6" in kind) else (64 << 20)
    if vmem_limit_bytes is None:
        vmem_limit_bytes = min(cap * 3 // 4, 96 << 20)
    if vmem_budget_bytes is None:
        vmem_budget_bytes = int(vmem_limit_bytes * 0.85)
    if target_out_bytes is None:
        target_out_bytes = (16 << 20) if cap <= (64 << 20) else (8 << 20)
    return vmem_limit_bytes, vmem_budget_bytes, target_out_bytes


def _choose_tiles(B, N, D, in_isz, out_isz, budget, target_out):
    """Pick (TB, TN) for blocks (TB, TN, D).

    TN is a multiple of 8 (or == N, TPU sublane rule); TB is a leading dim
    (unconstrained).  The double-buffered working set stays under `budget`,
    the per-step output block targets `target_out`, and the grid keeps >= 4
    steps when the problem is large enough (megacore + DMA overlap)."""
    Dp = _round_up(D, 128)
    res = 8 * Dp * 4                                   # resident weight rows (3 -> 8 sublanes)

    def out_bytes(tb, tn):
        return tb * _round_up(tn, 8) * Dp * out_isz

    def per_step(tb, tn):
        tnp = _round_up(tn, 8)
        return (tb * tnp * Dp * out_isz                # output block
                + tb * tnp * 128 * in_isz              # packed node feats (lane padded)
                + tb * 8 * Dp * 4)                     # per-batch weather+bias term (f32)

    def working_set(tb, tn):
        return 2 * (per_step(tb, tn) + res)            # double buffering

    def shrink_tn(tn):
        new = max(8, _round_up(pl.cdiv(tn, 2), 8))
        return new if new < tn else tn

    # 1) Node tile: full N unless a single-batch-row block blows the budget.
    tn = N
    while tn > 8 and working_set(1, tn) > budget:
        new = shrink_tn(tn)
        if new == tn:
            break
        tn = new

    # 2) Batch tile: as large as budget + output-block target allow.
    cap_budget = max(1, (budget // 2 - res) // max(1, per_step(1, tn)))
    cap_target = max(1, target_out // max(1, out_bytes(1, tn)))
    tb = max(1, min(B, cap_budget, cap_target))

    # 3) If the batch axis is forced to 1, keep the node block near the target
    #    so the grid stays long enough for pipelining / megacore.
    if tb == 1:
        while tn > 8 and out_bytes(1, tn) > 2 * target_out:
            new = shrink_tn(tn)
            if new == tn:
                break
            tn = new

    # 4) Grid-length guard: >= 4 steps when the problem allows.
    def steps(tb_, tn_):
        return pl.cdiv(B, tb_) * pl.cdiv(N, tn_)

    while steps(tb, tn) < 4:
        if tb > 1:
            tb = pl.cdiv(tb, 2)
        elif tn > 8:
            new = shrink_tn(tn)
            if new == tn:
                break
            tn = new
        else:
            break
    return tb, tn


def acsp_init_embedding(locs, max_cover, weather, w, b, *, out_dtype=None,
                        vmem_limit_bytes=None, vmem_budget_bytes=None,
                        target_out_bytes=None):
    """locs: [B, N, 2], max_cover: [B, N], weather: [B, 3],
    w: [6, D] (= torch Linear.weight.T, rows: x, y, max_cover, weather0..2),
    b: [D].  Returns [B, N, D] in `out_dtype` (default: locs.dtype)."""
    B, N, two = locs.shape
    assert two == 2
    D = w.shape[1]
    if out_dtype is None:
        out_dtype = locs.dtype

    limit, budget, target = _vmem_policy(
        vmem_limit_bytes, vmem_budget_bytes, target_out_bytes)

    f32 = jnp.float32
    # Pack the per-node features once ([B, N, 3]): one block / DMA instead of
    # two; the concat costs ~3/D of the output traffic.
    node_feats = jnp.concatenate(
        [locs, max_cover[..., None].astype(locs.dtype)], axis=-1)
    # Fold the batch-constant weather contribution and the bias into a single
    # lane-dense [B, 1, D] term (tiny XLA matmul in f32).
    wb = (jnp.einsum("bk,kd->bd", weather.astype(f32), w[3:6].astype(f32),
                     precision=jax.lax.Precision.HIGHEST)
          + b.astype(f32)).reshape(B, 1, D)
    w_node = w[0:3]

    in_isz = jnp.dtype(node_feats.dtype).itemsize
    out_isz = jnp.dtype(out_dtype).itemsize
    TB, TN = _choose_tiles(B, N, D, in_isz, out_isz, budget, target)
    grid = (pl.cdiv(B, TB), pl.cdiv(N, TN))

    return pl.pallas_call(
        _acsp_init_embed_kernel,
        out_shape=jax.ShapeDtypeStruct((B, N, D), out_dtype),
        grid_spec=pltpu.PrefetchScalarGridSpec(
            num_scalar_prefetch=0,
            grid=grid,
            in_specs=[
                pl.BlockSpec((TB, TN, 3), lambda i, j: (i, j, 0)),   # packed node feats
                pl.BlockSpec((TB, 1, D), lambda i, j: (i, 0, 0)),    # weather@W + b per row
                pl.BlockSpec((3, D), lambda i, j: (0, 0)),           # weight rows (resident)
            ],
            out_specs=pl.BlockSpec((TB, TN, D), lambda i, j: (i, j, 0)),
        ),
        compiler_params=pltpu.CompilerParams(
            dimension_semantics=("parallel", "parallel"),   # megacore on both grid axes
            vmem_limit_bytes=limit,
        ),
    )(node_feats, wb, w_node)


def _reference(locs, max_cover, weather, w, b):
    B, N, _ = locs.shape
    wth = jnp.broadcast_to(weather[:, None, :], (B, N, 3))
    feat = jnp.concatenate([locs, max_cover[..., None], wth], axis=-1)   # [B, N, 6]
    return jnp.einsum("bnk,kd->bnd", feat, w,
                      precision=jax.lax.Precision.HIGHEST) + b


if __name__ == "__main__":
    # Small but lane-dense config: B=2 batches, N=16 cities, D=128 embedding.
    B, N, D = 2, 16, 128
    key = jax.random.PRNGKey(0)
    k1, k2, k3, k4, k5 = jax.random.split(key, 5)

    locs = jax.random.uniform(k1, (B, N, 2), dtype=jnp.float32)
    max_cover = jax.random.uniform(k2, (B, N), dtype=jnp.float32)
    weather = jax.random.uniform(k3, (B, 3), dtype=jnp.float32)

    # nn.Linear(6, D): torch weight is [D, 6]; we store the transpose [6, D].
    w = jax.random.normal(k4, (6, D), dtype=jnp.float32) * 0.1
    b = jax.random.normal(k5, (D,), dtype=jnp.float32) * 0.1

    out = acsp_init_embedding(locs, max_cover, weather, w, b)
    out = jax.block_until_ready(out)

    ref = _reference(locs, max_cover, weather, w, b)
    assert out.shape == (B, N, D)
    assert jnp.allclose(out, ref, atol=1e-5, rtol=1e-5), "mismatch vs reference"

    print("KERNEL_OK")
</pallas_src>

<mosaic_0001>
module attributes {stable_mosaic.version = 11 : i64} {
  func.func @_acsp_init_embed_kernel(%arg0: i32, %arg1: i32, %arg2: memref<1x8x3xf32, #tpu.memory_space<vmem>>, %arg3: memref<1x1x128xf32, #tpu.memory_space<vmem>>, %arg4: memref<3x128xf32, #tpu.memory_space<vmem>>, %arg5: memref<1x8x128xf32, #tpu.memory_space<vmem>>) attributes {dimension_semantics = [#tpu.dimension_semantics<parallel>, #tpu.dimension_semantics<parallel>], iteration_bounds = array<i64: 2, 2>, scalar_prefetch = 0 : i64, scratch_operands = 0 : i64, tpu.core_type = #tpu.core_type<tc>, window_params = [{transform_indices = @transform_0, window_bounds = array<i64: 1, 8, 3>}, {transform_indices = @transform_1, window_bounds = array<i64: 1, 1, 128>}, {pipeline_mode = #tpu.pipeline_mode<synchronous>, transform_indices = @transform_2, window_bounds = array<i64: 3, 128>}, {transform_indices = @transform_3, window_bounds = array<i64: 1, 8, 128>}]} {
    %c0 = arith.constant 0 : index
    %c0_0 = arith.constant 0 : index
    %c0_1 = arith.constant 0 : index
    %0 = vector.load %arg2[%c0, %c0_0, %c0_1] : memref<1x8x3xf32, #tpu.memory_space<vmem>>, vector<1x8x3xf32>
    %c0_2 = arith.constant 0 : index
    %c0_3 = arith.constant 0 : index
    %1 = vector.load %arg4[%c0_2, %c0_3] : memref<3x128xf32, #tpu.memory_space<vmem>>, vector<3x128xf32>
    %2 = vector.extract_strided_slice %0 {offsets = [0, 0, 0], sizes = [1, 8, 1], strides = [1, 1, 1]} : vector<1x8x3xf32> to vector<1x8x1xf32>
    %3 = vector.extract_strided_slice %1 {offsets = [0, 0], sizes = [1, 128], strides = [1, 1]} : vector<3x128xf32> to vector<1x128xf32>
    %4 = vector.shape_cast %3 : vector<1x128xf32> to vector<1x1x128xf32>
    %5 = vector.broadcast %2 : vector<1x8x1xf32> to vector<1x8x128xf32>
    %6 = vector.broadcast %4 : vector<1x1x128xf32> to vector<1x8x128xf32>
    %7 = arith.mulf %5, %6 : vector<1x8x128xf32>
    %8 = vector.extract_strided_slice %0 {offsets = [0, 0, 1], sizes = [1, 8, 1], strides = [1, 1, 1]} : vector<1x8x3xf32> to vector<1x8x1xf32>
    %9 = vector.extract_strided_slice %1 {offsets = [1, 0], sizes = [1, 128], strides = [1, 1]} : vector<3x128xf32> to vector<1x128xf32>
    %10 = vector.shape_cast %9 : vector<1x128xf32> to vector<1x1x128xf32>
    %11 = vector.broadcast %8 : vector<1x8x1xf32> to vector<1x8x128xf32>
    %12 = vector.broadcast %10 : vector<1x1x128xf32> to vector<1x8x128xf32>
    %13 = arith.mulf %11, %12 : vector<1x8x128xf32>
    %14 = arith.addf %7, %13 : vector<1x8x128xf32>
    %15 = vector.extract_strided_slice %0 {offsets = [0, 0, 2], sizes = [1, 8, 1], strides = [1, 1, 1]} : vector<1x8x3xf32> to vector<1x8x1xf32>
    %16 = vector.extract_strided_slice %1 {offsets = [2, 0], sizes = [1, 128], strides = [1, 1]} : vector<3x128xf32> to vector<1x128xf32>
    %17 = vector.shape_cast %16 : vector<1x128xf32> to vector<1x1x128xf32>
    %18 = vector.broadcast %15 : vector<1x8x1xf32> to vector<1x8x128xf32>
    %19 = vector.broadcast %17 : vector<1x1x128xf32> to vector<1x8x128xf32>
    %20 = arith.mulf %18, %19 : vector<1x8x128xf32>
    %21 = arith.addf %14, %20 : vector<1x8x128xf32>
    %c0_4 = arith.constant 0 : index
    %c0_5 = arith.constant 0 : index
    %c0_6 = arith.constant 0 : index
    %22 = vector.load %arg3[%c0_4, %c0_5, %c0_6] : memref<1x1x128xf32, #tpu.memory_space<vmem>>, vector<1x1x128xf32>
    %23 = vector.broadcast %22 : vector<1x1x128xf32> to vector<1x8x128xf32>
    %24 = arith.addf %21, %23 : vector<1x8x128xf32>
    %c0_7 = arith.constant 0 : index
    %c0_8 = arith.constant 0 : index
    %c0_9 = arith.constant 0 : index
    %25 = vector.load %arg5[%c0_7, %c0_8, %c0_9] : memref<1x8x128xf32, #tpu.memory_space<vmem>>, vector<1x8x128xf32>
    tpu.vector_store %arg5[%c0_7, %c0_8, %c0_9], %24 {strides = array<i32>} : memref<1x8x128xf32, #tpu.memory_space<vmem>>, vector<1x8x128xf32>,
    return
  }
  func.func @transform_0(%arg0: i32, %arg1: i32) -> (i32, i32, i32) {
    %c0_i32 = arith.constant 0 : i32
    %c0_i32_0 = arith.constant 0 : i32
    return %arg0, %arg1, %c0_i32 : i32, i32, i32
  }
  func.func @transform_1(%arg0: i32, %arg1: i32) -> (i32, i32, i32) {
    %c0_i32 = arith.constant 0 : i32
    %c0_i32_0 = arith.constant 0 : i32
    %c0_i32_1 = arith.constant 0 : i32
    return %arg0, %c0_i32, %c0_i32_0 : i32, i32, i32
  }
  func.func @transform_2(%arg0: i32, %arg1: i32) -> (i32, i32) {
    %c0_i32 = arith.constant 0 : i32
    %c0_i32_0 = arith.constant 0 : i32
    %c0_i32_1 = arith.constant 0 : i32
    return %c0_i32, %c0_i32_0 : i32, i32
  }
  func.func @transform_3(%arg0: i32, %arg1: i32) -> (i32, i32, i32) {
    %c0_i32 = arith.constant 0 : i32
    %c0_i32_0 = arith.constant 0 : i32
    return %arg0, %arg1, %c0_i32 : i32, i32, i32
  }
}

</mosaic_0001>

<llo_original>
// kernel: tpu_custom_call.1
$region0: #{tpu_custom_call.1}
  #allocation0 [shape = 'u32[]', space=smem, size = 0x4, offset = 0x4, fixed_abs, tag = 'smem constant byte address 0x4 - core index']
  #allocation1 [shape = 'u32[72,128]{1,0:T(1,128)}', space=vmem, size = 0x9000, scoped, tag = 'internal scratch']
  %s0 = inlined_call_operand.vmem [shape: f32[2,16,3], index: 0, kind: input, shape index: {}]
  %s1 = inlined_call_operand.vmem [shape: f32[2,1,128], index: 1, kind: input, shape index: {}]
  %s2 = inlined_call_operand.vmem [shape: f32[3,128], index: 2, kind: input, shape index: {}]
  %s3 = inlined_call_operand.hbm [shape: f32[2,16,128], index: 3, kind: output, shape index: {}]
  %s4 = sld [smem:[#allocation0]]
  $region45: #{tpu_custom_call.1} parent=0
    _
  %s6 = ssub.s32 1, %s4
  %s7 = scalar_select 0, %s6, %s4
  $region1: #{tpu_custom_call.1} parent=0
    #allocation2 [shape = 'u8[8192]{0}', space=vmem, size = 0x2000, scoped, tag = 'output window, operand 0']
    #allocation3 [shape = 's32[2]{0}', space=sflag, size = 0x8, scoped, tag = 'scoped memory for tpu_custom_call.1']
    %8 = vsyncpa [#allocation3], 0
    %s9 = scalar_lea.sflag [#allocation3], 1
    %10 = vsyncpa %s9, 0
    loop: start=0, step=1, limit=6
    $region2: #{tpu_custom_call.1} parent=1 // loop_pre_header
      _
    $region3: #{tpu_custom_call.1} parent=1 // loop_header
      %s12 = sphi 0, %s16
      %p13 = scmp.ge.s32.totalorder %s12, 6
      %s19 = sphi 0, %s31
      %s20 = sphi 0, %s27
      %s21 = sphi 0, %s19
      %s22 = sphi 0, %s20
      %s23 = sphi 0, %s21
      %s24 = sphi 0, %s22
      %s36 = sphi 0, %s38
      %s39 = sphi 0, %s36
      %s40 = sphi 0, %s39
      %s56 = sphi 0, %s40
      %s62 = sphi 0, %s64
      %s65 = sphi 0, %s62
      %s66 = sphi 0, %s65
      %s82 = sphi 0, %s66
      %s86 = sphi 0, %s86
      %s88 = sphi 0, %s86
      %s89 = sphi 0, %s88
      %s103 = sphi 0, %s89
      %s111 = sphi 0, %s113
      %s114 = sphi 0, %s111
      %s115 = sphi 0, %s114
      %s131 = sphi 0, %s115
    $region4: #{tpu_custom_call.1} parent=1 // loop_header_branch
      %15 = sbr.rel (%p13) target = $region8
    $region5: #{tpu_custom_call.1} parent=1 // loop_body
      %s17 = ssub.s32 %s12, 1
      %s18 = ssub.s32 %s12, 2
      %s25 = sadd.s32 1, %s20
      %p26 = scmp.ge.s32.totalorder %s25, 2
      %s27 = scalar_select %p26, 0, %s25
      %s28 = sadd.s32 1, %s19
      %s29 = scalar_select %p26, %s28, %s19
      %p30 = scmp.ge.s32.totalorder %s29, 2
      %s31 = scalar_select %p30, 0, %s29
      %s32 = ssub.s32 %s19, %s31
      %s33 = ssub.s32 %s20, %s27
      %s34 = sor.u32 %s32, %s33
      %p35 = scmp.eq.s32.totalorder %s34, 0
      %s37 = sadd.s32 %s36, 1
      %s38 = scalar_select %p35, %s36, %s37
      %p41 = pneg %p35
      %p42 = scmp.eq.s32.totalorder %s12, 3
      %p43 = por %p41, %p42
      %p44 = scmp.ne.s32.totalorder %s36, %s39
      %p45 = scmp.eq.s32.totalorder %s12, 0
      %p46 = por %p44, %p45
      %p47 = scmp.ne.s32.totalorder %s36, %s39
      %p48 = scmp.eq.s32.totalorder %s17, 3
      %p49 = por %p47, %p48
      %p50 = scmp.ne.s32.totalorder %s39, %s40
      %p51 = scmp.eq.s32.totalorder %s17, 0
      %p52 = por %p50, %p51
      %p53 = scmp.ne.s32.totalorder %s39, %s40
      %p54 = scmp.eq.s32.totalorder %s18, 3
      %p55 = por %p53, %p54
      %p57 = scmp.ne.s32.totalorder %s40, %s56
      %p58 = scmp.eq.s32.totalorder %s18, 0
      %p59 = por %p57, %p58
      %s60 = ssub.s32 %s19, %s31
      %p61 = scmp.eq.s32.totalorder %s60, 0
      %s63 = sadd.s32 %s62, 1
      %s64 = scalar_select %p61, %s62, %s63
      %p67 = pneg %p61
      %p68 = scmp.eq.s32.totalorder %s12, 3
      %p69 = por %p67, %p68
      %p70 = scmp.ne.s32.totalorder %s62, %s65
      %p71 = scmp.eq.s32.totalorder %s12, 0
      %p72 = por %p70, %p71
      %p73 = scmp.ne.s32.totalorder %s62, %s65
      %p74 = scmp.eq.s32.totalorder %s17, 3
      %p75 = por %p73, %p74
      %p76 = scmp.ne.s32.totalorder %s65, %s66
      %p77 = scmp.eq.s32.totalorder %s17, 0
      %p78 = por %p76, %p77
      %p79 = scmp.ne.s32.totalorder %s65, %s66
      %p80 = scmp.eq.s32.totalorder %s18, 3
      %p81 = por %p79, %p80
      %p83 = scmp.ne.s32.totalorder %s66, %s82
      %p84 = scmp.eq.s32.totalorder %s18, 0
      %p85 = por %p83, %p84
      %s87 = sadd.s32 %s86, 1
      %p90 = scmp.eq.s32.totalorder %s12, 3
      %p91 = scmp.ne.s32.totalorder %s86, %s88
      %p92 = scmp.eq.s32.totalorder %s12, 0
      %p93 = por %p91, %p92
      %p94 = scmp.ne.s32.totalorder %s86, %s88
      %p95 = scmp.eq.s32.totalorder %s17, 3
      %p96 = por %p94, %p95
      %p97 = scmp.ne.s32.totalorder %s88, %s89
      %p98 = scmp.eq.s32.totalorder %s17, 0
      %p99 = por %p97, %p98
      %p100 = scmp.ne.s32.totalorder %s88, %s89
      %p101 = scmp.eq.s32.totalorder %s18, 3
      %p102 = por %p100, %p101
      %p104 = scmp.ne.s32.totalorder %s89, %s103
      %p105 = scmp.eq.s32.totalorder %s18, 0
      %p106 = por %p104, %p105
      %s107 = ssub.s32 %s19, %s31
      %s108 = ssub.s32 %s20, %s27
      %s109 = sor.u32 %s107, %s108
      %p110 = scmp.eq.s32.totalorder %s109, 0
      %s112 = sadd.s32 %s111, 1
      %s113 = scalar_select %p110, %s111, %s112
      %p116 = pneg %p110
      %p117 = scmp.eq.s32.totalorder %s12, 3
      %p118 = por %p116, %p117
      %p119 = scmp.ne.s32.totalorder %s111, %s114
      %p120 = scmp.eq.s32.totalorder %s12, 0
      %p121 = por %p119, %p120
      %p122 = scmp.ne.s32.totalorder %s111, %s114
      %p123 = scmp.eq.s32.totalorder %s17, 3
      %p124 = por %p122, %p123
      %p125 = scmp.ne.s32.totalorder %s114, %s115
      %p126 = scmp.eq.s32.totalorder %s17, 0
      %p127 = por %p125, %p126
      %p128 = scmp.ne.s32.totalorder %s114, %s115
      %p129 = scmp.eq.s32.totalorder %s18, 3
      %p130 = por %p128, %p129
      %p132 = scmp.ne.s32.totalorder %s115, %s131
      %p133 = scmp.eq.s32.totalorder %s18, 0
      %p134 = por %p132, %p133
      %p135 = scmp.le.s32.totalorder 1, %s12
      %p136 = scmp.lt.s32.totalorder %s12, 5
      %p137 = pnand %p135, %p136
      %p138 = pneg %p137
      // Predicated region
      $region9: #{tpu_custom_call.1} parent=5 // pred_check
        _
      $region10: #{tpu_custom_call.1} parent=5 // pred_check_branch
        %140 = sbr.rel (%p137) target = $region12
      $region11: #{tpu_custom_call.1} parent=5 // pred_region
        %s141 = ssub.s32 %s12, 1
        // Predicated region
        $region13: #{tpu_custom_call.1} parent=11 // pred_check
          %p142 = pneg %p99
        $region14: #{tpu_custom_call.1} parent=11 // pred_check_branch
          %144 = sbr.rel (%p142) target = $region16
        $region15: #{tpu_custom_call.1} parent=11 // pred_region
          _
        $region16: #{tpu_custom_call.1} parent=11 // pred_fallthru
          _
      $region12: #{tpu_custom_call.1} parent=5 // pred_fallthru
        _
      %p145 = scmp.lt.s32.totalorder %s12, 4
      // Predicated region
      $region17: #{tpu_custom_call.1} parent=5 // pred_check
        %p146 = pneg %p145
      $region18: #{tpu_custom_call.1} parent=5 // pred_check_branch
        %148 = sbr.rel (%p146) target = $region20
      $region19: #{tpu_custom_call.1} parent=5 // pred_region
        // Predicated region
        $region21: #{tpu_custom_call.1} parent=19 // pred_check
          %p149 = pneg %p46
        $region22: #{tpu_custom_call.1} parent=19 // pred_check_branch
          %151 = sbr.rel (%p149) target = $region24
        $region23: #{tpu_custom_call.1} parent=19 // pred_region
          %p152 = scmp.lt.s32.totalorder %s19, 1
          %s153 = scalar_select %p152, %s19, 1
          %p154 = scmp.lt.s32.totalorder %s20, 1
          %s155 = scalar_select %p154, %s20, 1
          %s156 = smul.addr %s153, 2
          %s157 = sadd.s32 %s155, %s156
          %s158 = smul.addr %s157, 8
          %s159 = scalar_lea.vmem %s0, %s158
        $region24: #{tpu_custom_call.1} parent=19 // pred_fallthru
          _
        // Predicated region
        $region25: #{tpu_custom_call.1} parent=19 // pred_check
          %p160 = pneg %p72
        $region26: #{tpu_custom_call.1} parent=19 // pred_check_branch
          %162 = sbr.rel (%p160) target = $region28
        $region27: #{tpu_custom_call.1} parent=19 // pred_region
          %p163 = scmp.lt.s32.totalorder %s19, 1
          %s164 = scalar_select %p163, %s19, 1
          %s165 = scalar_lea.vmem %s1, %s164
        $region28: #{tpu_custom_call.1} parent=19 // pred_fallthru
          _
      $region20: #{tpu_custom_call.1} parent=5 // pred_fallthru
        _
      %p166 = scmp.le.s32.totalorder 1, %s12
      %p167 = scmp.lt.s32.totalorder %s12, 5
      %p168 = pnand %p166, %p167
      %p169 = pneg %p168
      // Predicated region
      $region29: #{tpu_custom_call.1} parent=5 // pred_check
        _
      $region30: #{tpu_custom_call.1} parent=5 // pred_check_branch
        %171 = sbr.rel (%p168) target = $region32
      $region31: #{tpu_custom_call.1} parent=5 // pred_region
        %s172 = ssub.s32 %s12, 1
        %p173 = scmp.lt.s32.totalorder %s21, 1
        %s174 = scalar_select %p173, %s21, 1
        %p175 = scmp.lt.s32.totalorder %s22, 1
        %s176 = scalar_select %p175, %s22, 1
        %s177 = smul.addr %s174, 2
        %s178 = sadd.s32 %s176, %s177
        %s179 = smul.addr %s178, 8
        %s180 = scalar_lea.vmem %s0, %s179
        %p181 = pneg %p52
        %p182 = pneg %p49
        %p183 = scmp.lt.s32.totalorder %s21, 1
        %s184 = scalar_select %p183, %s21, 1
        %s185 = scalar_lea.vmem %s1, %s184
        %p186 = pneg %p78
        %p187 = pneg %p75
        %p188 = pneg %p99
        %p189 = pneg %p96
        %p190 = pneg %p127
        %p191 = pneg %p124
        %s192 = sand.u32 %s114, 1
        %s193 = scalar_lea.sflag [#allocation3], %s192
        %s194 = sand.u32 %s114, 1
        %s195 = smul.addr %s194, 8
        %s196 = scalar_lea.vmem [#allocation2], %s195
        %p197 = scmp.lt.s32.totalorder %s21, 1
        %s198 = scalar_select %p197, %s21, 1
        %p199 = scmp.lt.s32.totalorder %s22, 1
        %s200 = scalar_select %p199, %s22, 1
        %s201 = smul.addr %s198, 2
        %s202 = sadd.s32 %s200, %s201
        %s203 = smul.addr %s202, 8
        %s204 = scalar_lea.vmem %s0, %s203
        %p205 = scmp.lt.s32.totalorder %s21, 1
        %s206 = scalar_select %p205, %s21, 1
        %s207 = scalar_lea.vmem %s1, %s206
        %v208 = vld [vmem:[%s204] sm:$0xff]
        %v209 = vld [vmem:[%s2] sm:$0x7]
        %211 = vset.pattern.permute.xlu0 0
        %212 = vperm.xlu0 %211, %v208
        %v213 = vpop.permute.xlu0 %212
        %v215 = vperm.slane %v209, 0
        %v216 = vmul.f32 %v213, %v215
        %217 = vset.pattern.permute.xlu0 1
        %218 = vperm.xlu0 %217, %v208
        %v219 = vpop.permute.xlu0 %218
        %v221 = vperm.slane %v209, 1
        %v222 = vmul.f32 %v219, %v221
        %v223 = vadd.f32 %v216, %v222
        %224 = vset.pattern.permute.xlu0 2
        %225 = vperm.xlu0 %224, %v208
        %v226 = vpop.permute.xlu0 %225
        %v228 = vperm.slane %v209, 2
        %v229 = vmul.f32 %v226, %v228
        %v230 = vadd.f32 %v223, %v229
        %v231 = vld [vmem:[%s207] sm:$0x1]
        %v233 = vperm.slane %v231, 0
        %v235 = vadd.f32 %v230, %v233
        %236 = vst [vmem:[%s196] sm:$0xff] %v235
        %s237 = sand.u32 %s114, 1
        %s238 = scalar_lea.sflag [#allocation3], %s237
        %s239 = sand.u32 %s114, 1
        %s240 = smul.addr %s239, 8
        %s241 = scalar_lea.vmem [#allocation2], %s240
        // Predicated region
        $region33: #{tpu_custom_call.1} parent=31 // pred_check
          %p242 = pneg %p124
        $region34: #{tpu_custom_call.1} parent=31 // pred_check_branch
          %244 = sbr.rel (%p242) target = $region36
        $region35: #{tpu_custom_call.1} parent=31 // pred_region
          %246 = vsyncadd %s238, 0
          %s247 = smul.addr %s21, 2
          %s248 = sadd.s32 %s22, %s247
          %s249 = smul.addr %s248, 8
          %s250 = scalar_lea.hbm %s3, %s249
          %s252 = sshll.u32 %s241, 4
          %s253 = int_to_ptr.vmem [resolvable:$true] %s252
          %s254 = sshll.u32 %s250, 4
          %s255 = int_to_ptr.hbm [resolvable:$true] %s254
          %257 = dma.vmem_to_hbm [thread:$0]  %s253, 128, %s255, %s238
        $region36: #{tpu_custom_call.1} parent=31 // pred_fallthru
          _
      $region32: #{tpu_custom_call.1} parent=5 // pred_fallthru
        _
      %p258 = scmp.le.s32.totalorder 2, %s12
      // Predicated region
      $region37: #{tpu_custom_call.1} parent=5 // pred_check
        %p259 = pneg %p258
      $region38: #{tpu_custom_call.1} parent=5 // pred_check_branch
        %261 = sbr.rel (%p259) target = $region40
      $region39: #{tpu_custom_call.1} parent=5 // pred_region
        %s262 = ssub.s32 %s12, 2
        // Predicated region
        $region41: #{tpu_custom_call.1} parent=39 // pred_check
          %p263 = pneg %p130
        $region42: #{tpu_custom_call.1} parent=39 // pred_check_branch
          %265 = sbr.rel (%p263) target = $region44
        $region43: #{tpu_custom_call.1} parent=39 // pred_region
          %s266 = sand.u32 %s115, 1
          %s267 = scalar_lea.sflag [#allocation3], %s266
          %s268 = sand.u32 %s115, 1
          %s269 = smul.addr %s268, 8
          %s270 = scalar_lea.vmem [#allocation2], %s269
          %272 = dma.done %s267, 128
        $region44: #{tpu_custom_call.1} parent=39 // pred_fallthru
          _
      $region40: #{tpu_custom_call.1} parent=5 // pred_fallthru
        _
    $region6: #{tpu_custom_call.1} parent=1 // loop_footer
      %s16 = sadd.s32 1, %s12
    $region7: #{tpu_custom_call.1} parent=1 // loop_footer_branch
      %11 = sbr.rel target = $region3
    $region8: #{tpu_custom_call.1} parent=1 // loop_exit
      _
    %273 = vsyncpa [#allocation3], 1
    %s274 = scalar_lea.sflag [#allocation3], 1
    %275 = vsyncpa %s274, 1

</llo_original>
